<compile_context>
chip_gen: v5e
topology: v5e:2x2
jax: 0.10.0
libtpu: 0.0.40
codegen_flags: <defaults>
</compile_context>

<pallas_src>
import functools

import jax
import jax.numpy as jnp
from jax import lax
from jax.experimental import pallas as pl
from jax.experimental.pallas import tpu as pltpu

_TARGET_BLOCK_BYTES = 2 * 1024 * 1024      # ~2 MiB per input block
_VMEM_LIMIT_BYTES = 32 * 1024 * 1024       # safe on v5e/v6e (128 MiB) and v7x (64 MiB)


# --------------------------------------------------------------------------- #
# Kernels
# --------------------------------------------------------------------------- #
def _stats_kernel(x_ref, sum_ref, sq_ref, *, n_chunks):
    """Accumulate per-row sum / sum-of-squares across the lane-tile grid axis.

    sum_ref / sq_ref are resident accumulators of shape (tile_r, lanes) where
    lanes = 128 (lane-dense, pure VPU adds) when the lane tile is a multiple of
    128, else 1 (single cross-lane reduce fallback).
    """
    j = pl.program_id(1)

    @pl.when(j == 0)
    def _init():
        sum_ref[...] = jnp.zeros_like(sum_ref)
        sq_ref[...] = jnp.zeros_like(sq_ref)

    x = x_ref[...].astype(jnp.float32)          # (tile_r, tile_c)

    if n_chunks is None:
        # tile_c not a multiple of 128: one XLU reduce per block (rare path).
        sum_ref[...] += jnp.sum(x, axis=1, keepdims=True)
        sq_ref[...] += jnp.sum(x * x, axis=1, keepdims=True)
    else:
        s = sum_ref[...]
        ss = sq_ref[...]
        for k in range(n_chunks):               # static unroll; VPU adds only
            chunk = x[:, k * 128:(k + 1) * 128]
            s = s + chunk
            ss = ss + chunk * chunk
        sum_ref[...] = s
        sq_ref[...] = ss


def _apply_kernel(scale_ref, shift_ref, x_ref, o_ref):
    """out = x * scale + shift; (tile_r, 1) params broadcast along the lanes."""
    x = x_ref[...].astype(jnp.float32)
    o_ref[...] = (x * scale_ref[...] + shift_ref[...]).astype(o_ref.dtype)


# --------------------------------------------------------------------------- #
# Tiling helpers
# --------------------------------------------------------------------------- #
def _pick_divisor(dim, unit, cap):
    """Largest multiple of `unit` that divides `dim` and is <= cap.

    If `dim` is not a multiple of `unit`, fall back to the full extent (legal
    for Mosaic when the block dim equals the array dim; no tiling on that axis).
    """
    if dim % unit != 0:
        # TODO(synk): for very large lane-indivisible extents, pad + mask would
        # restore pipelining; full-extent block is used here for correctness.
        return dim
    if dim <= cap:
        return dim
    t = (cap // unit) * unit
    while t >= unit:
        if dim % t == 0:
            return t
        t -= unit
    return dim


def _pick_tiles(nc, l, dtype, target_bytes=_TARGET_BLOCK_BYTES):
    item = jnp.dtype(dtype).itemsize
    tile_c = _pick_divisor(l, 128, max(128, target_bytes // (item * 8)))
    tile_r = _pick_divisor(nc, 8, max(8, target_bytes // (item * tile_c)))
    return tile_r, tile_c


# --------------------------------------------------------------------------- #
# pallas_call wrappers
# --------------------------------------------------------------------------- #
def _stats_call(x2, tile_r, tile_c):
    nc, l = x2.shape
    grid = (nc // tile_r, l // tile_c)
    if tile_c % 128 == 0:
        lanes, n_chunks = 128, tile_c // 128
    else:
        lanes, n_chunks = 1, None

    kernel = functools.partial(_stats_kernel, n_chunks=n_chunks)
    return pl.pallas_call(
        kernel,
        out_shape=(
            jax.ShapeDtypeStruct((nc, lanes), jnp.float32),
            jax.ShapeDtypeStruct((nc, lanes), jnp.float32),
        ),
        grid_spec=pltpu.PrefetchScalarGridSpec(
            num_scalar_prefetch=0,
            grid=grid,
            in_specs=[pl.BlockSpec((tile_r, tile_c), lambda i, j: (i, j))],
            out_specs=(
                pl.BlockSpec((tile_r, lanes), lambda i, j: (i, 0)),
                pl.BlockSpec((tile_r, lanes), lambda i, j: (i, 0)),
            ),
        ),
        compiler_params=pltpu.CompilerParams(
            dimension_semantics=("parallel", "arbitrary"),
            vmem_limit_bytes=_VMEM_LIMIT_BYTES,
        ),
    )(x2)


def _affine_call(x2, scale_rows, shift_rows, tile_r, tile_c):
    nc, l = x2.shape
    grid = (nc // tile_r, l // tile_c)
    return pl.pallas_call(
        _apply_kernel,
        out_shape=jax.ShapeDtypeStruct((nc, l), x2.dtype),
        grid_spec=pltpu.PrefetchScalarGridSpec(
            num_scalar_prefetch=0,
            grid=grid,
            in_specs=[
                pl.BlockSpec((tile_r, 1), lambda i, j: (i, 0)),
                pl.BlockSpec((tile_r, 1), lambda i, j: (i, 0)),
                pl.BlockSpec((tile_r, tile_c), lambda i, j: (i, j)),
            ],
            out_specs=pl.BlockSpec((tile_r, tile_c), lambda i, j: (i, j)),
        ),
        compiler_params=pltpu.CompilerParams(
            dimension_semantics=("parallel", "parallel"),
            vmem_limit_bytes=_VMEM_LIMIT_BYTES,
        ),
    )(scale_rows, shift_rows, x2)


# --------------------------------------------------------------------------- #
# Public entry points
# --------------------------------------------------------------------------- #
def actnorm_apply_pallas(x_nchw, scale_c, shift_c):
    """Already-initialized forward: x * scale + shift (per channel)."""
    n, c, h, w = x_nchw.shape
    nc, l = n * c, h * w
    x2 = x_nchw.reshape(nc, l)                              # zero-copy for NCHW
    tile_r, tile_c = _pick_tiles(nc, l, x_nchw.dtype)

    scale_rows = jnp.tile(scale_c.astype(jnp.float32), n).reshape(nc, 1)
    shift_rows = jnp.tile(shift_c.astype(jnp.float32), n).reshape(nc, 1)

    out2 = _affine_call(x2, scale_rows, shift_rows, tile_r, tile_c)
    return out2.reshape(n, c, h, w)


def actnorm_pallas(x_nchw, *, eps=1e-6):
    """First-call forward of ActNormLP2D_else: data-dependent init + apply.

    Returns (out_nchw, scale_c, shift_c); scale/shift are the values the
    PyTorch module would store into its Parameters during lazy init.
    """
    n, c, h, w = x_nchw.shape
    nc, l = n * c, h * w
    x2 = x_nchw.reshape(nc, l)                              # zero-copy for NCHW
    tile_r, tile_c = _pick_tiles(nc, l, x_nchw.dtype)

    # Pass 1: per-row, per-lane partial sums (Pallas), then a tiny JAX finalize
    # over the lane axis and the batch replicas of each channel.
    psum, psq = _stats_call(x2, tile_r, tile_c)
    count = float(n * h * w)
    sums = psum.reshape(n, c, -1).sum(axis=(0, 2))
    sqs = psq.reshape(n, c, -1).sum(axis=(0, 2))
    mean = sums / count
    var = jnp.maximum(sqs / count - mean * mean, 0.0)       # guard cancellation
    scale = jnp.clip(1.0 / jnp.sqrt(var + eps), -1.0, 1.0)
    shift = -mean * scale

    # Pass 2: fully parallel affine apply, native-dtype I/O.
    scale_rows = jnp.tile(scale, n).reshape(nc, 1)
    shift_rows = jnp.tile(shift, n).reshape(nc, 1)
    out2 = _affine_call(x2, scale_rows, shift_rows, tile_r, tile_c)

    return out2.reshape(n, c, h, w), scale, shift


def actnorm_reference(x_nchw, eps=1e-6):
    """Pure-JAX reference mirroring the PyTorch first-call forward."""
    x = x_nchw.astype(jnp.float32)
    mean = jnp.mean(x, axis=(0, 2, 3))
    var = jnp.mean((x - mean[None, :, None, None]) ** 2, axis=(0, 2, 3))
    scale = jnp.clip(1.0 / jnp.sqrt(var + eps), -1.0, 1.0)
    shift = -mean * scale
    out = x * scale[None, :, None, None] + shift[None, :, None, None]
    return out, scale, shift


if __name__ == "__main__":
    # TODO(synk): the module's stateful lazy init (self._init flag, Parameter
    # .data assignment) has no in-kernel equivalent; the kernel returns the
    # computed scale/shift so the caller carries that state.
    N, C, H, W = 2, 4, 16, 16
    key = jax.random.PRNGKey(0)
    base = jax.random.normal(key, (N, C, H, W), dtype=jnp.float32)
    ch_std = jnp.array([0.5, 1.5, 2.0, 3.0], jnp.float32).reshape(1, C, 1, 1)
    ch_mean = jnp.array([-1.0, 0.0, 2.0, 0.5], jnp.float32).reshape(1, C, 1, 1)
    x = base * ch_std + ch_mean       # distinct per-channel stats; exercises clamp

    # First-call forward (data-dependent init + apply), f32.
    out, scale, shift = actnorm_pallas(x)
    out = jax.block_until_ready(out)

    ref_out, ref_scale, ref_shift = actnorm_reference(x)
    ref_out = jax.block_until_ready(ref_out)

    assert out.shape == (N, C, H, W), out.shape
    assert out.dtype == x.dtype, out.dtype
    assert jnp.allclose(scale, ref_scale, rtol=1e-5, atol=1e-5), \
        float(jnp.max(jnp.abs(scale - ref_scale)))
    assert jnp.allclose(shift, ref_shift, rtol=1e-5, atol=1e-5), \
        float(jnp.max(jnp.abs(shift - ref_shift)))
    assert jnp.allclose(out, ref_out, rtol=1e-4, atol=1e-4), \
        float(jnp.max(jnp.abs(out - ref_out)))

    # Already-initialized forward (second call): pure affine apply.
    out2 = actnorm_apply_pallas(x, scale, shift)
    out2 = jax.block_until_ready(out2)
    assert jnp.allclose(out2, ref_out, rtol=1e-4, atol=1e-4), \
        float(jnp.max(jnp.abs(out2 - ref_out)))

    # Native-dtype path: bf16 in / bf16 out (loose tolerance for quantization).
    xb = x.astype(jnp.bfloat16)
    outb, scale_b, shift_b = actnorm_pallas(xb)
    outb = jax.block_until_ready(outb)
    assert outb.dtype == jnp.bfloat16, outb.dtype
    assert jnp.allclose(outb.astype(jnp.float32), ref_out, rtol=1e-1, atol=1e-1), \
        float(jnp.max(jnp.abs(outb.astype(jnp.float32) - ref_out)))

    print("KERNEL_OK")
</pallas_src>

<mosaic_0001>
module attributes {stable_mosaic.version = 11 : i64} {
  func.func @_stats_kernel(%arg0: i32, %arg1: i32, %arg2: memref<8x256xf32, #tpu.memory_space<vmem>>, %arg3: memref<8x128xf32, #tpu.memory_space<vmem>>, %arg4: memref<8x128xf32, #tpu.memory_space<vmem>>) attributes {dimension_semantics = [#tpu.dimension_semantics<parallel>, #tpu.dimension_semantics<arbitrary>], iteration_bounds = array<i64: 1, 1>, scalar_prefetch = 0 : i64, scratch_operands = 0 : i64, tpu.core_type = #tpu.core_type<tc>, window_params = [{transform_indices = @transform_0, window_bounds = array<i64: 8, 256>}, {transform_indices = @transform_1, window_bounds = array<i64: 8, 128>}, {transform_indices = @transform_2, window_bounds = array<i64: 8, 128>}]} {
    %c0_i32 = arith.constant 0 : i32
    %0 = arith.cmpi eq, %arg1, %c0_i32 : i32
    %1 = arith.extui %0 : i1 to i32
    %c0_i32_0 = arith.constant 0 : i32
    %2 = arith.cmpi ne, %1, %c0_i32_0 : i32
    scf.if %2 {
      %cst = arith.constant 0.000000e+00 : f32
      %16 = vector.broadcast %cst : f32 to vector<8x128xf32>
      %c0_10 = arith.constant 0 : index
      %c0_11 = arith.constant 0 : index
      %17 = vector.load %arg3[%c0_10, %c0_11] : memref<8x128xf32, #tpu.memory_space<vmem>>, vector<8x128xf32>
      tpu.vector_store %arg3[%c0_10, %c0_11], %16 {strides = array<i32>} : memref<8x128xf32, #tpu.memory_space<vmem>>, vector<8x128xf32>,
      %cst_12 = arith.constant 0.000000e+00 : f32
      %18 = vector.broadcast %cst_12 : f32 to vector<8x128xf32>
      %c0_13 = arith.constant 0 : index
      %c0_14 = arith.constant 0 : index
      %19 = vector.load %arg4[%c0_13, %c0_14] : memref<8x128xf32, #tpu.memory_space<vmem>>, vector<8x128xf32>
      tpu.vector_store %arg4[%c0_13, %c0_14], %18 {strides = array<i32>} : memref<8x128xf32, #tpu.memory_space<vmem>>, vector<8x128xf32>,
    } else {
    }
    %c0 = arith.constant 0 : index
    %c0_1 = arith.constant 0 : index
    %3 = vector.load %arg2[%c0, %c0_1] : memref<8x256xf32, #tpu.memory_space<vmem>>, vector<8x256xf32>
    %c0_2 = arith.constant 0 : index
    %c0_3 = arith.constant 0 : index
    %4 = vector.load %arg3[%c0_2, %c0_3] : memref<8x128xf32, #tpu.memory_space<vmem>>, vector<8x128xf32>
    %c0_4 = arith.constant 0 : index
    %c0_5 = arith.constant 0 : index
    %5 = vector.load %arg4[%c0_4, %c0_5] : memref<8x128xf32, #tpu.memory_space<vmem>>, vector<8x128xf32>
    %6 = vector.extract_strided_slice %3 {offsets = [0, 0], sizes = [8, 128], strides = [1, 1]} : vector<8x256xf32> to vector<8x128xf32>
    %7 = arith.addf %4, %6 : vector<8x128xf32>
    %8 = arith.mulf %6, %6 : vector<8x128xf32>
    %9 = arith.addf %5, %8 : vector<8x128xf32>
    %10 = vector.extract_strided_slice %3 {offsets = [0, 128], sizes = [8, 128], strides = [1, 1]} : vector<8x256xf32> to vector<8x128xf32>
    %11 = arith.addf %7, %10 : vector<8x128xf32>
    %12 = arith.mulf %10, %10 : vector<8x128xf32>
    %13 = arith.addf %9, %12 : vector<8x128xf32>
    %c0_6 = arith.constant 0 : index
    %c0_7 = arith.constant 0 : index
    %14 = vector.load %arg3[%c0_6, %c0_7] : memref<8x128xf32, #tpu.memory_space<vmem>>, vector<8x128xf32>
    tpu.vector_store %arg3[%c0_6, %c0_7], %11 {strides = array<i32>} : memref<8x128xf32, #tpu.memory_space<vmem>>, vector<8x128xf32>,
    %c0_8 = arith.constant 0 : index
    %c0_9 = arith.constant 0 : index
    %15 = vector.load %arg4[%c0_8, %c0_9] : memref<8x128xf32, #tpu.memory_space<vmem>>, vector<8x128xf32>
    tpu.vector_store %arg4[%c0_8, %c0_9], %13 {strides = array<i32>} : memref<8x128xf32, #tpu.memory_space<vmem>>, vector<8x128xf32>,
    return
  }
  func.func @transform_0(%arg0: i32, %arg1: i32) -> (i32, i32) {
    %c0_i32 = arith.constant 0 : i32
    return %arg0, %arg1 : i32, i32
  }
  func.func @transform_1(%arg0: i32, %arg1: i32) -> (i32, i32) {
    %c0_i32 = arith.constant 0 : i32
    %c0_i32_0 = arith.constant 0 : i32
    return %arg0, %c0_i32 : i32, i32
  }
  func.func @transform_2(%arg0: i32, %arg1: i32) -> (i32, i32) {
    %c0_i32 = arith.constant 0 : i32
    %c0_i32_0 = arith.constant 0 : i32
    return %arg0, %c0_i32 : i32, i32
  }
}

</mosaic_0001>

<llo_original>
// kernel: tpu_custom_call.1
$region0: #{tpu_custom_call.1}
  #allocation0 [shape = 'u32[]', space=smem, size = 0x4, offset = 0x4, fixed_abs, tag = 'smem constant byte address 0x4 - core index']
  #allocation1 [shape = 'u32[72,128]{1,0:T(1,128)}', space=vmem, size = 0x9000, scoped, tag = 'internal scratch']
  %s0 = inlined_call_operand.hbm [shape: f32[8,256], index: 0, kind: input, shape index: {}]
  %s1 = inlined_call_operand.hbm [shape: f32[8,128], index: 1, kind: output, shape index: {0}]
  %s2 = inlined_call_operand.hbm [shape: f32[8,128], index: 2, kind: output, shape index: {1}]
  %3 = xla_tuple %s1, %s2
  %s4 = sld [smem:[#allocation0]]
  $region30: #{tpu_custom_call.1} parent=0
    _
  %s6 = ssub.s32 1, %s4
  %s7 = scalar_select 0, %s6, %s4
  $region1: #{tpu_custom_call.1} parent=0
    #allocation2 [shape = 'u8[8192]{0}', space=vmem, size = 0x2000, scoped, tag = 'input window, operand 0, single buffered']
    #allocation3 [shape = 's32[1]{0}', space=sflag, size = 0x4, scoped, tag = 'scoped memory for tpu_custom_call.1']
    #allocation4 [shape = 's32[1]{0}', space=sflag, size = 0x4, scoped, tag = 'scoped memory for tpu_custom_call.1']
    #allocation5 [shape = 'u8[4096]{0}', space=vmem, size = 0x1000, scoped, tag = 'output window, operand 0, single buffered']
    #allocation6 [shape = 'u8[4096]{0}', space=vmem, size = 0x1000, scoped, tag = 'output window, operand 1, single buffered']
    #allocation7 [shape = 's32[1]{0}', space=sflag, size = 0x4, scoped, tag = 'scoped memory for tpu_custom_call.1']
    %8 = vsyncpa [#allocation3], 0
    %9 = vsyncpa [#allocation4], 0
    %10 = vsyncpa [#allocation7], 0
    // Predicated region
    $region2: #{tpu_custom_call.1} parent=1 // pred_check
      _
    $region3: #{tpu_custom_call.1} parent=1 // pred_check_branch
      %12 = sbr.rel (0) target = $region5
    $region4: #{tpu_custom_call.1} parent=1 // pred_region
      %14 = vsyncadd [#allocation3], 0
      %s16 = sshll.u32 %s0, 4
      %s17 = int_to_ptr.hbm [resolvable:$true] %s16
      %s18 = sshll.u32 [#allocation2], 4
      %s19 = int_to_ptr.vmem [resolvable:$true] %s18
      %21 = dma.hbm_to_vmem [thread:$0]  %s17, 256, %s19, [#allocation3]
    $region5: #{tpu_custom_call.1} parent=1 // pred_fallthru
      _
    // Predicated region
    $region6: #{tpu_custom_call.1} parent=1 // pred_check
      _
    $region7: #{tpu_custom_call.1} parent=1 // pred_check_branch
      %23 = sbr.rel (0) target = $region9
    $region8: #{tpu_custom_call.1} parent=1 // pred_region
      %25 = dma.done [#allocation3], 256
    $region9: #{tpu_custom_call.1} parent=1 // pred_fallthru
      _
    %p26 = scmp.eq.s32.totalorder 0, 0
    // Predicated region
    $region10: #{tpu_custom_call.1} parent=1 // pred_check
      %p27 = pneg %p26
    $region11: #{tpu_custom_call.1} parent=1 // pred_check_branch
      %29 = sbr.rel (%p27) target = $region13
    $region12: #{tpu_custom_call.1} parent=1 // pred_region
      %30 = vst [vmem:[#allocation5] sm:$0xff] 0.0
      %31 = vst [vmem:[#allocation6] sm:$0xff] 0.0
    $region13: #{tpu_custom_call.1} parent=1 // pred_fallthru
      _
    %v32 = vld [vmem:[#allocation2] sm:$0xff]
    %v33 = vld [vmem:[#allocation2 + $0x8] sm:$0xff]
    %v34 = vld [vmem:[#allocation5] sm:$0xff]
    %v35 = vld [vmem:[#allocation6] sm:$0xff]
    %v36 = vadd.f32 %v34, %v32
    %v37 = vmul.f32 %v32, %v32
    %v38 = vadd.f32 %v35, %v37
    %v39 = vadd.f32 %v36, %v33
    %v40 = vmul.f32 %v33, %v33
    %v41 = vadd.f32 %v38, %v40
    %42 = vst [vmem:[#allocation5] sm:$0xff] %v39
    %43 = vst [vmem:[#allocation6] sm:$0xff] %v41
    // Predicated region
    $region14: #{tpu_custom_call.1} parent=1 // pred_check
      _
    $region15: #{tpu_custom_call.1} parent=1 // pred_check_branch
      %45 = sbr.rel (0) target = $region17
    $region16: #{tpu_custom_call.1} parent=1 // pred_region
      %47 = vsyncadd [#allocation4], 0
      %s49 = sshll.u32 [#allocation5], 4
      %s50 = int_to_ptr.vmem [resolvable:$true] %s49
      %s51 = sshll.u32 %s1, 4
      %s52 = int_to_ptr.hbm [resolvable:$true] %s51
      %54 = dma.vmem_to_hbm [thread:$0]  %s50, 128, %s52, [#allocation4]
    $region17: #{tpu_custom_call.1} parent=1 // pred_fallthru
      _
    // Predicated region
    $region18: #{tpu_custom_call.1} parent=1 // pred_check
      _
    $region19: #{tpu_custom_call.1} parent=1 // pred_check_branch
      %56 = sbr.rel (0) target = $region21
    $region20: #{tpu_custom_call.1} parent=1 // pred_region
      %58 = vsyncadd [#allocation7], 0
      %s60 = sshll.u32 [#allocation6], 4
      %s61 = int_to_ptr.vmem [resolvable:$true] %s60
      %s62 = sshll.u32 %s2, 4
      %s63 = int_to_ptr.hbm [resolvable:$true] %s62
      %65 = dma.vmem_to_hbm [thread:$0]  %s61, 128, %s63, [#allocation7]
    $region21: #{tpu_custom_call.1} parent=1 // pred_fallthru
      _
    // Predicated region
    $region22: #{tpu_custom_call.1} parent=1 // pred_check
      _
    $region23: #{tpu_custom_call.1} parent=1 // pred_check_branch
      %67 = sbr.rel (0) target = $region25
    $region24: #{tpu_custom_call.1} parent=1 // pred_region
      %69 = dma.done [#allocation4], 128
    $region25: #{tpu_custom_call.1} parent=1 // pred_fallthru
      _
    // Predicated region
    $region26: #{tpu_custom_call.1} parent=1 // pred_check
      _
    $region27: #{tpu_custom_call.1} parent=1 // pred_check_branch
      %71 = sbr.rel (0) target = $region29
    $region28: #{tpu_custom_call.1} parent=1 // pred_region
      %73 = dma.done [#allocation7], 128
    $region29: #{tpu_custom_call.1} parent=1 // pred_fallthru
      _
    %74 = vsyncpa [#allocation3], 1
    %75 = vsyncpa [#allocation4], 1
    %76 = vsyncpa [#allocation7], 1

</llo_original>
